<compile_context>
chip_gen: v7x
topology: tpu7x:2x2x1
jax: 0.10.0
libtpu: 0.0.40
codegen_flags: <defaults>
</compile_context>

<pallas_src>
import jax
import jax.numpy as jnp
from jax.experimental import pallas as pl
from jax.experimental.pallas import tpu as pltpu


# ----------------------------- kernels -------------------------------------


def _ae_kernel_fused(x_ref, w1_ref, b1_ref, wm_ref, bm_ref, w2_ref, b2_ref,
                     out_ref):
    """3-matmul path: linear latent folded into W_mid = we2 @ wd1."""
    cdt = w1_ref.dtype
    x = x_ref[...].astype(cdt)
    h = jnp.dot(x, w1_ref[...], preferred_element_type=jnp.float32) + b1_ref[...]
    h = jnp.maximum(h, 0.0)                                         # encoder ReLU (f32)
    g = jnp.dot(h.astype(cdt), wm_ref[...],
                preferred_element_type=jnp.float32) + bm_ref[...]
    g = jnp.maximum(g, 0.0)                                         # decoder ReLU (f32)
    y = jnp.dot(g.astype(cdt), w2_ref[...],
                preferred_element_type=jnp.float32) + b2_ref[...]
    out_ref[...] = y.astype(out_ref.dtype)


def _ae_kernel(x_ref,
               we1_ref, be1_ref, we2_ref, be2_ref,     # encoder params
               wd1_ref, bd1_ref, wd2_ref, bd2_ref,     # decoder params
               out_ref):
    """4-matmul path (latent z materialized in-registers)."""
    cdt = we1_ref.dtype
    x = x_ref[...].astype(cdt)
    h = jnp.dot(x, we1_ref[...], preferred_element_type=jnp.float32) + be1_ref[...]
    h = jnp.maximum(h, 0.0)
    z = jnp.dot(h.astype(cdt), we2_ref[...],
                preferred_element_type=jnp.float32) + be2_ref[...]  # latent (linear)
    g = jnp.dot(z.astype(cdt), wd1_ref[...],
                preferred_element_type=jnp.float32) + bd1_ref[...]
    g = jnp.maximum(g, 0.0)
    y = jnp.dot(g.astype(cdt), wd2_ref[...],
                preferred_element_type=jnp.float32) + bd2_ref[...]
    out_ref[...] = y.astype(out_ref.dtype)


# ----------------------------- helpers --------------------------------------


def _round_up(n, m):
    return ((n + m - 1) // m) * m


def _cdiv(a, b):
    return -(-a // b)


def _pad2d(a, rows, cols):
    return jnp.pad(a, ((0, rows - a.shape[0]), (0, cols - a.shape[1])))


def _vmem_limit_bytes():
    """VMEM budget from physical capacity (64 MiB/TC on v7x, 128 MiB on v5e/v6e)."""
    phys = 64 * 1024 * 1024
    try:
        info = pltpu.get_tpu_info()
        phys = int(getattr(info, "vmem_capacity_bytes", phys))
    except Exception:
        pass
    # Keep only a small reserve so weight-resident configs still fit on v7x.
    return min(phys - 8 * 1024 * 1024, 120 * 1024 * 1024)


# ----------------------------- wrapper --------------------------------------


def autoencoder_forward(x, params, *, fuse_latent=None, batch_tile=512,
                        compute_dtype=jnp.bfloat16, out_dtype=None):
    """AutoEncoder forward: decoder(encoder(x)).

    x: [B, D_in].  params: (we1, be1, we2, be2, wd1, bd1, wd2, bd2).
    fuse_latent: None = auto (fold the *linear* latent layer only when it does not
      increase padded MXU FLOPs).  compute_dtype: MXU operand dtype (bf16 default =
      full-rate MXU + half the weight HBM/VMEM traffic); accumulation stays f32.
    Jit this wrapper so the f32->compute_dtype weight casts / latent fold are cached
    rather than recomputed per call.
    """
    we1, be1, we2, be2, wd1, bd1, wd2, bd2 = [
        jnp.asarray(a, jnp.float32) for a in params
    ]
    B, D_in = x.shape
    H_e = we1.shape[1]          # encoder hidden
    L = we2.shape[1]            # latent dim
    H_d = wd1.shape[1]          # decoder hidden
    out_dtype = x.dtype if out_dtype is None else jnp.dtype(out_dtype)
    cdt = jnp.dtype(compute_dtype)

    # Only internal (hidden / latent) dims are zero-padded to the 128 lane width.
    # D_in is left unpadded: x / out use full-extent last-dim blocks, so there is no
    # wrapper-side pad of x and no output slice (each would be an extra HBM pass).
    Hep = _round_up(H_e, 128)
    Hdp = _round_up(H_d, 128)
    Lp = _round_up(L, 128)

    w1 = _pad2d(we1, D_in, Hep).astype(cdt)
    b1 = _pad2d(be1, 1, Hep)                    # biases stay f32 (zero-padded -> ReLU(0)=0)

    if fuse_latent is None:
        # Fuse only when the folded hidden x hidden matmul is not more MXU work
        # than the two latent matmuls it replaces.
        fuse_latent = Hep * Hdp <= Hep * Lp + Lp * Hdp
    # TODO(synk): the fold is only valid because the latent layer is linear; gate on
    #             the actual params_encoder/params_decoder activation config.

    if fuse_latent:
        w_mid = _pad2d(we2 @ wd1, Hep, Hdp).astype(cdt)   # fold computed in f32
        b_mid = _pad2d(be2 @ wd1 + bd1, 1, Hdp)
        w_out = _pad2d(wd2, Hdp, D_in).astype(cdt)
        b_out = _pad2d(bd2, 1, D_in)
        weight_args = (w1, b1, w_mid, b_mid, w_out, b_out)
        kernel = _ae_kernel_fused
        flops = 2 * B * (D_in * Hep + Hep * Hdp + Hdp * D_in)
    else:
        w2 = _pad2d(we2, Hep, Lp).astype(cdt)
        b2 = _pad2d(be2, 1, Lp)
        w3 = _pad2d(wd1, Lp, Hdp).astype(cdt)
        b3 = _pad2d(bd1, 1, Hdp)
        w4 = _pad2d(wd2, Hdp, D_in).astype(cdt)
        b4 = _pad2d(bd2, 1, D_in)
        weight_args = (w1, b1, w2, b2, w3, b3, w4, b4)
        kernel = _ae_kernel
        flops = 2 * B * (D_in * Hep + Hep * Lp + Lp * Hdp + Hdp * D_in)

    # --- batch tiling: no batch padding; the ragged trailing tile is masked by Pallas
    # (rows are independent, so garbage in the padded rows never reaches valid output).
    align = 16 if cdt == jnp.bfloat16 else 8
    n_target = max(2, _cdiv(B, max(int(batch_tile), 1)))   # >=2 tiles feeds both v7x TCs
    TB = _round_up(_cdiv(B, n_target), align)
    if TB >= B:
        TB = B                                             # single full-extent tile

    # --- VMEM feasibility: shrink the batch tile if the resident footprint is too big.
    vmem_limit = _vmem_limit_bytes()
    w_bytes = sum(int(a.size) * a.dtype.itemsize for a in weight_args)

    def _tile_bytes(tb):
        io = 2 * tb * D_in * (x.dtype.itemsize + out_dtype.itemsize)   # 2-deep x/out pipeline
        interm = 3 * tb * max(Hep, Hdp) * 4                            # f32 intermediates slack
        return io + interm

    while TB > align and w_bytes + _tile_bytes(TB) > (vmem_limit * 7) // 10:
        TB = max(align, _round_up(TB // 2, align))
        if TB >= B:
            TB = B
            break
    # TODO(synk): if the resident weights alone exceed the v7x budget (very large hidden),
    #             add a hidden-axis ("arbitrary") grid split with an f32 accumulator
    #             instead of requiring all weights co-resident.

    n_tiles = _cdiv(B, TB)

    bytes_accessed = (x.size * x.dtype.itemsize
                      + B * D_in * out_dtype.itemsize
                      + w_bytes)
    cost = pl.CostEstimate(flops=flops, transcendentals=0,
                           bytes_accessed=bytes_accessed)

    def _call(weight_pipeline_mode):
        x_spec = pl.BlockSpec((TB, D_in), lambda i: (i, 0))
        out_spec = pl.BlockSpec((TB, D_in), lambda i: (i, 0))
        if weight_pipeline_mode is None:
            w_specs = [pl.BlockSpec(a.shape, lambda i: (0, 0)) for a in weight_args]
        else:
            w_specs = [pl.BlockSpec(a.shape, lambda i: (0, 0),
                                    pipeline_mode=weight_pipeline_mode)
                       for a in weight_args]
        return pl.pallas_call(
            kernel,
            out_shape=jax.ShapeDtypeStruct((B, D_in), out_dtype),
            grid=(n_tiles,),
            in_specs=[x_spec] + w_specs,
            out_specs=out_spec,
            compiler_params=pltpu.CompilerParams(
                dimension_semantics=("parallel",),       # megacore batch sharding on v7x
                vmem_limit_bytes=vmem_limit,
            ),
            cost_estimate=cost,
        )(x, *weight_args)

    try:
        # Constant-index weight blocks are fetched once; single-buffer them so they do
        # not pay the default 2x pipeline allocation (halves resident weight VMEM).
        return _call(pl.Buffered(1))
    except Exception:
        # Fallback for lowerings without per-spec pipeline_mode support.
        return _call(None)


# ----------------------------- reference / params ---------------------------


def make_params(key, d_in, d_hidden, d_latent, dtype=jnp.float32):
    """Deterministic synthetic parameters (torch-like uniform init)."""
    ks = jax.random.split(key, 8)

    def lin(kw, kb, fan_in, fan_out):
        bound = 1.0 / jnp.sqrt(fan_in)
        w = jax.random.uniform(kw, (fan_in, fan_out), dtype, -bound, bound)
        b = jax.random.uniform(kb, (1, fan_out), dtype, -bound, bound)
        return w, b

    we1, be1 = lin(ks[0], ks[1], d_in, d_hidden)       # encoder layer 1
    we2, be2 = lin(ks[2], ks[3], d_hidden, d_latent)   # encoder layer 2 (latent)
    wd1, bd1 = lin(ks[4], ks[5], d_latent, d_hidden)   # decoder layer 1
    wd2, bd2 = lin(ks[6], ks[7], d_hidden, d_in)       # decoder layer 2 (output)
    return (we1, be1, we2, be2, wd1, bd1, wd2, bd2)


def reference_forward(x, params):
    we1, be1, we2, be2, wd1, bd1, wd2, bd2 = params
    h = jnp.maximum(x @ we1 + be1, 0.0)
    z = h @ we2 + be2
    g = jnp.maximum(z @ wd1 + bd1, 0.0)
    return g @ wd2 + bd2


# ----------------------------- demo / check ----------------------------------


if __name__ == "__main__":
    key = jax.random.PRNGKey(0)
    k_x, k_x2, k_p = jax.random.split(key, 3)

    B, D_IN, D_HIDDEN, D_LATENT = 2, 16, 32, 8     # small demo shapes
    x = jax.random.normal(k_x, (B, D_IN), jnp.float32)
    params = make_params(k_p, D_IN, D_HIDDEN, D_LATENT)
    y_ref = reference_forward(x, params)

    # Default fast path: bf16 MXU operands, f32 accumulation, auto latent fusion.
    y_fast = autoencoder_forward(x, params)
    jax.block_until_ready(y_fast)
    assert y_fast.shape == (B, D_IN)
    assert jnp.allclose(y_fast, y_ref, atol=1e-1, rtol=1e-1), "bf16 fast path mismatch"

    # f32 unfused path: bit-tight vs reference.
    y_f32 = autoencoder_forward(x, params, fuse_latent=False,
                                compute_dtype=jnp.float32)
    jax.block_until_ready(y_f32)
    assert jnp.allclose(y_f32, y_ref, atol=1e-5, rtol=1e-5), "f32 path mismatch"

    # Multi-tile grid with a ragged trailing batch tile (no wrapper-side padding).
    B2 = 20
    x2 = jax.random.normal(k_x2, (B2, D_IN), jnp.float32)
    y2 = autoencoder_forward(x2, params, fuse_latent=False,
                             compute_dtype=jnp.float32, batch_tile=8)
    jax.block_until_ready(y2)
    assert jnp.allclose(y2, reference_forward(x2, params),
                        atol=1e-5, rtol=1e-5), "ragged batch-tile mismatch"

    print("KERNEL_OK")
</pallas_src>

<mosaic_0001>
module attributes {stable_mosaic.version = 11 : i64} {
  func.func @_ae_kernel_fused(%arg0: i32, %arg1: memref<2x16xf32, #tpu.memory_space<vmem>>, %arg2: memref<16x128xbf16, #tpu.memory_space<vmem>>, %arg3: memref<1x128xf32, #tpu.memory_space<vmem>>, %arg4: memref<128x128xbf16, #tpu.memory_space<vmem>>, %arg5: memref<1x128xf32, #tpu.memory_space<vmem>>, %arg6: memref<128x16xbf16, #tpu.memory_space<vmem>>, %arg7: memref<1x16xf32, #tpu.memory_space<vmem>>, %arg8: memref<2x16xf32, #tpu.memory_space<vmem>>) attributes {dimension_semantics = [#tpu.dimension_semantics<parallel>], iteration_bounds = array<i64: 1>, scalar_prefetch = 0 : i64, scratch_operands = 0 : i64, tpu.core_type = #tpu.core_type<tc>, window_params = [{transform_indices = @transform_0, window_bounds = array<i64: 2, 16>}, {pipeline_mode = #tpu.pipeline_mode<synchronous>, transform_indices = @transform_1, window_bounds = array<i64: 16, 128>}, {pipeline_mode = #tpu.pipeline_mode<synchronous>, transform_indices = @transform_2, window_bounds = array<i64: 1, 128>}, {pipeline_mode = #tpu.pipeline_mode<synchronous>, transform_indices = @transform_3, window_bounds = array<i64: 128, 128>}, {pipeline_mode = #tpu.pipeline_mode<synchronous>, transform_indices = @transform_4, window_bounds = array<i64: 1, 128>}, {pipeline_mode = #tpu.pipeline_mode<synchronous>, transform_indices = @transform_5, window_bounds = array<i64: 128, 16>}, {pipeline_mode = #tpu.pipeline_mode<synchronous>, transform_indices = @transform_6, window_bounds = array<i64: 1, 16>}, {transform_indices = @transform_7, window_bounds = array<i64: 2, 16>}]} {
    %c0 = arith.constant 0 : index
    %c0_0 = arith.constant 0 : index
    %0 = vector.load %arg1[%c0, %c0_0] : memref<2x16xf32, #tpu.memory_space<vmem>>, vector<2x16xf32>
    %1 = arith.truncf %0 : vector<2x16xf32> to vector<2x16xbf16>
    %c0_1 = arith.constant 0 : index
    %c0_2 = arith.constant 0 : index
    %2 = vector.load %arg2[%c0_1, %c0_2] : memref<16x128xbf16, #tpu.memory_space<vmem>>, vector<16x128xbf16>
    %cst = arith.constant dense<0.000000e+00> : vector<2x128xf32>
    %3 = tpu.matmul %1, %2, %cst {dimension_numbers = #tpu.dot_dimension_numbers<[1], [0], [0], [1], [0, 0, 1, 1], [], []>} : vector<2x16xbf16>, vector<16x128xbf16>, vector<2x128xf32> -> vector<2x128xf32>
    %c0_3 = arith.constant 0 : index
    %c0_4 = arith.constant 0 : index
    %4 = vector.load %arg3[%c0_3, %c0_4] : memref<1x128xf32, #tpu.memory_space<vmem>>, vector<1x128xf32>
    %5 = vector.broadcast %4 : vector<1x128xf32> to vector<2x128xf32>
    %6 = arith.addf %3, %5 : vector<2x128xf32>
    %cst_5 = arith.constant 0.000000e+00 : f32
    %7 = vector.broadcast %cst_5 : f32 to vector<2x128xf32>
    %8 = arith.maximumf %6, %7 : vector<2x128xf32>
    %9 = arith.truncf %8 : vector<2x128xf32> to vector<2x128xbf16>
    %c0_6 = arith.constant 0 : index
    %c0_7 = arith.constant 0 : index
    %10 = vector.load %arg4[%c0_6, %c0_7] : memref<128x128xbf16, #tpu.memory_space<vmem>>, vector<128x128xbf16>
    %cst_8 = arith.constant dense<0.000000e+00> : vector<2x128xf32>
    %11 = tpu.matmul %9, %10, %cst_8 {dimension_numbers = #tpu.dot_dimension_numbers<[1], [0], [0], [1], [0, 0, 1, 1], [], []>} : vector<2x128xbf16>, vector<128x128xbf16>, vector<2x128xf32> -> vector<2x128xf32>
    %c0_9 = arith.constant 0 : index
    %c0_10 = arith.constant 0 : index
    %12 = vector.load %arg5[%c0_9, %c0_10] : memref<1x128xf32, #tpu.memory_space<vmem>>, vector<1x128xf32>
    %13 = vector.broadcast %12 : vector<1x128xf32> to vector<2x128xf32>
    %14 = arith.addf %11, %13 : vector<2x128xf32>
    %cst_11 = arith.constant 0.000000e+00 : f32
    %15 = vector.broadcast %cst_11 : f32 to vector<2x128xf32>
    %16 = arith.maximumf %14, %15 : vector<2x128xf32>
    %17 = arith.truncf %16 : vector<2x128xf32> to vector<2x128xbf16>
    %c0_12 = arith.constant 0 : index
    %c0_13 = arith.constant 0 : index
    %18 = vector.load %arg6[%c0_12, %c0_13] : memref<128x16xbf16, #tpu.memory_space<vmem>>, vector<128x16xbf16>
    %cst_14 = arith.constant dense<0.000000e+00> : vector<2x16xf32>
    %19 = tpu.matmul %17, %18, %cst_14 {dimension_numbers = #tpu.dot_dimension_numbers<[1], [0], [0], [1], [0, 0, 1, 1], [], []>} : vector<2x128xbf16>, vector<128x16xbf16>, vector<2x16xf32> -> vector<2x16xf32>
    %c0_15 = arith.constant 0 : index
    %c0_16 = arith.constant 0 : index
    %20 = vector.load %arg7[%c0_15, %c0_16] : memref<1x16xf32, #tpu.memory_space<vmem>>, vector<1x16xf32>
    %21 = vector.broadcast %20 : vector<1x16xf32> to vector<2x16xf32>
    %22 = arith.addf %19, %21 : vector<2x16xf32>
    %c0_17 = arith.constant 0 : index
    %c0_18 = arith.constant 0 : index
    %23 = vector.load %arg8[%c0_17, %c0_18] : memref<2x16xf32, #tpu.memory_space<vmem>>, vector<2x16xf32>
    tpu.vector_store %arg8[%c0_17, %c0_18], %22 {strides = array<i32>} : memref<2x16xf32, #tpu.memory_space<vmem>>, vector<2x16xf32>,
    return
  }
  func.func @transform_0(%arg0: i32) -> (i32, i32) {
    %c0_i32 = arith.constant 0 : i32
    %c0_i32_0 = arith.constant 0 : i32
    return %arg0, %c0_i32 : i32, i32
  }
  func.func @transform_1(%arg0: i32) -> (i32, i32) {
    %c0_i32 = arith.constant 0 : i32
    %c0_i32_0 = arith.constant 0 : i32
    %c0_i32_1 = arith.constant 0 : i32
    return %c0_i32, %c0_i32_0 : i32, i32
  }
  func.func @transform_2(%arg0: i32) -> (i32, i32) {
    %c0_i32 = arith.constant 0 : i32
    %c0_i32_0 = arith.constant 0 : i32
    %c0_i32_1 = arith.constant 0 : i32
    return %c0_i32, %c0_i32_0 : i32, i32
  }
  func.func @transform_3(%arg0: i32) -> (i32, i32) {
    %c0_i32 = arith.constant 0 : i32
    %c0_i32_0 = arith.constant 0 : i32
    %c0_i32_1 = arith.constant 0 : i32
    return %c0_i32, %c0_i32_0 : i32, i32
  }
  func.func @transform_4(%arg0: i32) -> (i32, i32) {
    %c0_i32 = arith.constant 0 : i32
    %c0_i32_0 = arith.constant 0 : i32
    %c0_i32_1 = arith.constant 0 : i32
    return %c0_i32, %c0_i32_0 : i32, i32
  }
  func.func @transform_5(%arg0: i32) -> (i32, i32) {
    %c0_i32 = arith.constant 0 : i32
    %c0_i32_0 = arith.constant 0 : i32
    %c0_i32_1 = arith.constant 0 : i32
    return %c0_i32, %c0_i32_0 : i32, i32
  }
  func.func @transform_6(%arg0: i32) -> (i32, i32) {
    %c0_i32 = arith.constant 0 : i32
    %c0_i32_0 = arith.constant 0 : i32
    %c0_i32_1 = arith.constant 0 : i32
    return %c0_i32, %c0_i32_0 : i32, i32
  }
  func.func @transform_7(%arg0: i32) -> (i32, i32) {
    %c0_i32 = arith.constant 0 : i32
    %c0_i32_0 = arith.constant 0 : i32
    return %arg0, %c0_i32 : i32, i32
  }
}

module attributes {stable_mosaic.version = 11 : i64} {
  func.func @_ae_kernel_fused(%arg0: i32, %arg1: memref<2x16xf32, #tpu.memory_space<vmem>>, %arg2: memref<16x128xbf16, #tpu.memory_space<vmem>>, %arg3: memref<1x128xf32, #tpu.memory_space<vmem>>, %arg4: memref<128x128xbf16, #tpu.memory_space<vmem>>, %arg5: memref<1x128xf32, #tpu.memory_space<vmem>>, %arg6: memref<128x16xbf16, #tpu.memory_space<vmem>>, %arg7: memref<1x16xf32, #tpu.memory_space<vmem>>, %arg8: memref<2x16xf32, #tpu.memory_space<vmem>>) attributes {dimension_semantics = [#tpu.dimension_semantics<parallel>], iteration_bounds = array<i64: 1>, scalar_prefetch = 0 : i64, scratch_operands = 0 : i64, tpu.core_type = #tpu.core_type<tc>, window_params = [{transform_indices = @transform_0, window_bounds = array<i64: 2, 16>}, {pipeline_mode = #tpu.pipeline_mode<synchronous>, transform_indices = @transform_1, window_bounds = array<i64: 16, 128>}, {pipeline_mode = #tpu.pipeline_mode<synchronous>, transform_indices = @transform_2, window_bounds = array<i64: 1, 128>}, {pipeline_mode = #tpu.pipeline_mode<synchronous>, transform_indices = @transform_3, window_bounds = array<i64: 128, 128>}, {pipeline_mode = #tpu.pipeline_mode<synchronous>, transform_indices = @transform_4, window_bounds = array<i64: 1, 128>}, {pipeline_mode = #tpu.pipeline_mode<synchronous>, transform_indices = @transform_5, window_bounds = array<i64: 128, 16>}, {pipeline_mode = #tpu.pipeline_mode<synchronous>, transform_indices = @transform_6, window_bounds = array<i64: 1, 16>}, {transform_indices = @transform_7, window_bounds = array<i64: 2, 16>}]} {
    %c0 = arith.constant 0 : index
    %c0_0 = arith.constant 0 : index
    %0 = vector.load %arg1[%c0, %c0_0] : memref<2x16xf32, #tpu.memory_space<vmem>>, vector<2x16xf32>
    %1 = arith.truncf %0 : vector<2x16xf32> to vector<2x16xbf16>
    %c0_1 = arith.constant 0 : index
    %c0_2 = arith.constant 0 : index
    %2 = vector.load %arg2[%c0_1, %c0_2] : memref<16x128xbf16, #tpu.memory_space<vmem>>, vector<16x128xbf16>
    %cst = arith.constant dense<0.000000e+00> : vector<2x128xf32>
    %3 = tpu.matmul %1, %2, %cst {dimension_numbers = #tpu.dot_dimension_numbers<[1], [0], [0], [1], [0, 0, 1, 1], [], []>} : vector<2x16xbf16>, vector<16x128xbf16>, vector<2x128xf32> -> vector<2x128xf32>
    %c0_3 = arith.constant 0 : index
    %c0_4 = arith.constant 0 : index
    %4 = vector.load %arg3[%c0_3, %c0_4] : memref<1x128xf32, #tpu.memory_space<vmem>>, vector<1x128xf32>
    %5 = vector.broadcast %4 : vector<1x128xf32> to vector<2x128xf32>
    %6 = arith.addf %3, %5 : vector<2x128xf32>
    %cst_5 = arith.constant 0.000000e+00 : f32
    %7 = vector.broadcast %cst_5 : f32 to vector<2x128xf32>
    %8 = arith.maximumf %6, %7 : vector<2x128xf32>
    %9 = arith.truncf %8 : vector<2x128xf32> to vector<2x128xbf16>
    %c0_6 = arith.constant 0 : index
    %c0_7 = arith.constant 0 : index
    %10 = vector.load %arg4[%c0_6, %c0_7] : memref<128x128xbf16, #tpu.memory_space<vmem>>, vector<128x128xbf16>
    %cst_8 = arith.constant dense<0.000000e+00> : vector<2x128xf32>
    %11 = tpu.matmul %9, %10, %cst_8 {dimension_numbers = #tpu.dot_dimension_numbers<[1], [0], [0], [1], [0, 0, 1, 1], [], []>} : vector<2x128xbf16>, vector<128x128xbf16>, vector<2x128xf32> -> vector<2x128xf32>
    %c0_9 = arith.constant 0 : index
    %c0_10 = arith.constant 0 : index
    %12 = vector.load %arg5[%c0_9, %c0_10] : memref<1x128xf32, #tpu.memory_space<vmem>>, vector<1x128xf32>
    %13 = vector.broadcast %12 : vector<1x128xf32> to vector<2x128xf32>
    %14 = arith.addf %11, %13 : vector<2x128xf32>
    %cst_11 = arith.constant 0.000000e+00 : f32
    %15 = vector.broadcast %cst_11 : f32 to vector<2x128xf32>
    %16 = arith.maximumf %14, %15 : vector<2x128xf32>
    %17 = arith.truncf %16 : vector<2x128xf32> to vector<2x128xbf16>
    %c0_12 = arith.constant 0 : index
    %c0_13 = arith.constant 0 : index
    %18 = vector.load %arg6[%c0_12, %c0_13] : memref<128x16xbf16, #tpu.memory_space<vmem>>, vector<128x16xbf16>
    %cst_14 = arith.constant dense<0.000000e+00> : vector<2x16xf32>
    %19 = tpu.matmul %17, %18, %cst_14 {dimension_numbers = #tpu.dot_dimension_numbers<[1], [0], [0], [1], [0, 0, 1, 1], [], []>} : vector<2x128xbf16>, vector<128x16xbf16>, vector<2x16xf32> -> vector<2x16xf32>
    %c0_15 = arith.constant 0 : index
    %c0_16 = arith.constant 0 : index
    %20 = vector.load %arg7[%c0_15, %c0_16] : memref<1x16xf32, #tpu.memory_space<vmem>>, vector<1x16xf32>
    %21 = vector.broadcast %20 : vector<1x16xf32> to vector<2x16xf32>
    %22 = arith.addf %19, %21 : vector<2x16xf32>
    %c0_17 = arith.constant 0 : index
    %c0_18 = arith.constant 0 : index
    %23 = vector.load %arg8[%c0_17, %c0_18] : memref<2x16xf32, #tpu.memory_space<vmem>>, vector<2x16xf32>
    tpu.vector_store %arg8[%c0_17, %c0_18], %22 {strides = array<i32>} : memref<2x16xf32, #tpu.memory_space<vmem>>, vector<2x16xf32>,
    return
  }
  func.func @transform_0(%arg0: i32) -> (i32, i32) {
    %c0_i32 = arith.constant 0 : i32
    %c0_i32_0 = arith.constant 0 : i32
    return %arg0, %c0_i32 : i32, i32
  }
  func.func @transform_1(%arg0: i32) -> (i32, i32) {
    %c0_i32 = arith.constant 0 : i32
    %c0_i32_0 = arith.constant 0 : i32
    %c0_i32_1 = arith.constant 0 : i32
    return %c0_i32, %c0_i32_0 : i32, i32
  }
  func.func @transform_2(%arg0: i32) -> (i32, i32) {
    %c0_i32 = arith.constant 0 : i32
    %c0_i32_0 = arith.constant 0 : i32
    %c0_i32_1 = arith.constant 0 : i32
    return %c0_i32, %c0_i32_0 : i32, i32
  }
  func.func @transform_3(%arg0: i32) -> (i32, i32) {
    %c0_i32 = arith.constant 0 : i32
    %c0_i32_0 = arith.constant 0 : i32
    %c0_i32_1 = arith.constant 0 : i32
    return %c0_i32, %c0_i32_0 : i32, i32
  }
  func.func @transform_4(%arg0: i32) -> (i32, i32) {
    %c0_i32 = arith.constant 0 : i32
    %c0_i32_0 = arith.constant 0 : i32
    %c0_i32_1 = arith.constant 0 : i32
    return %c0_i32, %c0_i32_0 : i32, i32
  }
  func.func @transform_5(%arg0: i32) -> (i32, i32) {
    %c0_i32 = arith.constant 0 : i32
    %c0_i32_0 = arith.constant 0 : i32
    %c0_i32_1 = arith.constant 0 : i32
    return %c0_i32, %c0_i32_0 : i32, i32
  }
  func.func @transform_6(%arg0: i32) -> (i32, i32) {
    %c0_i32 = arith.constant 0 : i32
    %c0_i32_0 = arith.constant 0 : i32
    %c0_i32_1 = arith.constant 0 : i32
    return %c0_i32, %c0_i32_0 : i32, i32
  }
  func.func @transform_7(%arg0: i32) -> (i32, i32) {
    %c0_i32 = arith.constant 0 : i32
    %c0_i32_0 = arith.constant 0 : i32
    return %arg0, %c0_i32 : i32, i32
  }
}

</mosaic_0001>

<llo_original>
// kernel: tpu_custom_call.1
$region0: #{tpu_custom_call.1}
  #allocation0 [shape = 'u32[]', space=smem, size = 0x4, offset = 0x4, fixed_abs, tag = 'smem constant byte address 0x4 - core index']
  #allocation1 [shape = 'u32[144,128]{1,0:T(1,128)}', space=vmem, size = 0x12000, scoped, tag = 'internal scratch']
  %s0 = inlined_call_operand.vmem [shape: f32[2,16], index: 0, kind: input, shape index: {}]
  %s1 = inlined_call_operand.vmem [shape: bf16[16,128], index: 1, kind: input, shape index: {}]
  %s2 = inlined_call_operand.vmem [shape: f32[1,128], index: 2, kind: input, shape index: {}]
  %s3 = inlined_call_operand.vmem [shape: bf16[128,128], index: 3, kind: input, shape index: {}]
  %s4 = inlined_call_operand.vmem [shape: f32[1,128], index: 4, kind: input, shape index: {}]
  %s5 = inlined_call_operand.vmem [shape: bf16[128,16], index: 5, kind: input, shape index: {}]
  %s6 = inlined_call_operand.vmem [shape: f32[1,16], index: 6, kind: input, shape index: {}]
  %s7 = inlined_call_operand.hbm [shape: f32[2,16], index: 7, kind: output, shape index: {}]
  %s8 = sld [smem:[#allocation0]]
  $region38: #{tpu_custom_call.1} parent=0
    _
  %s10 = ssub.s32 1, %s8
  %s11 = scalar_select 0, %s10, %s8
  $region1: #{tpu_custom_call.1} parent=0
    #allocation2 [shape = 'u8[1024]{0}', space=vmem, size = 0x400, scoped, tag = 'output window, operand 0, single buffered']
    #allocation3 [shape = 's32[1]{0}', space=sflag, size = 0x4, scoped, tag = 'scoped memory for tpu_custom_call.1']
    %12 = vsyncpa [#allocation3], 0
    // Predicated region
    $region2: #{tpu_custom_call.1} parent=1 // pred_check
      _
    $region3: #{tpu_custom_call.1} parent=1 // pred_check_branch
      %14 = sbr.rel (0) target = $region5
    $region4: #{tpu_custom_call.1} parent=1 // pred_region
      _
    $region5: #{tpu_custom_call.1} parent=1 // pred_fallthru
      _
    // Predicated region
    $region6: #{tpu_custom_call.1} parent=1 // pred_check
      _
    $region7: #{tpu_custom_call.1} parent=1 // pred_check_branch
      %16 = sbr.rel (0) target = $region9
    $region8: #{tpu_custom_call.1} parent=1 // pred_region
      _
    $region9: #{tpu_custom_call.1} parent=1 // pred_fallthru
      _
    // Predicated region
    $region10: #{tpu_custom_call.1} parent=1 // pred_check
      _
    $region11: #{tpu_custom_call.1} parent=1 // pred_check_branch
      %18 = sbr.rel (0) target = $region13
    $region12: #{tpu_custom_call.1} parent=1 // pred_region
      _
    $region13: #{tpu_custom_call.1} parent=1 // pred_fallthru
      _
    // Predicated region
    $region14: #{tpu_custom_call.1} parent=1 // pred_check
      _
    $region15: #{tpu_custom_call.1} parent=1 // pred_check_branch
      %20 = sbr.rel (0) target = $region17
    $region16: #{tpu_custom_call.1} parent=1 // pred_region
      _
    $region17: #{tpu_custom_call.1} parent=1 // pred_fallthru
      _
    // Predicated region
    $region18: #{tpu_custom_call.1} parent=1 // pred_check
      _
    $region19: #{tpu_custom_call.1} parent=1 // pred_check_branch
      %22 = sbr.rel (0) target = $region21
    $region20: #{tpu_custom_call.1} parent=1 // pred_region
      _
    $region21: #{tpu_custom_call.1} parent=1 // pred_fallthru
      _
    // Predicated region
    $region22: #{tpu_custom_call.1} parent=1 // pred_check
      _
    $region23: #{tpu_custom_call.1} parent=1 // pred_check_branch
      %24 = sbr.rel (0) target = $region25
    $region24: #{tpu_custom_call.1} parent=1 // pred_region
      _
    $region25: #{tpu_custom_call.1} parent=1 // pred_fallthru
      _
    // Predicated region
    $region26: #{tpu_custom_call.1} parent=1 // pred_check
      _
    $region27: #{tpu_custom_call.1} parent=1 // pred_check_branch
      %26 = sbr.rel (0) target = $region29
    $region28: #{tpu_custom_call.1} parent=1 // pred_region
      _
    $region29: #{tpu_custom_call.1} parent=1 // pred_fallthru
      _
    %v28 = vld [vmem:[%s0] sm:$0x3]
    %v29 = vpack.c.bf16 %v28, %v28
    %v30 = vld [vmem:[%s1] sm:$0xf]
    %v31 = vld [vmem:[%s1 + $0x4] sm:$0xf]
    %v32 = vld [vmem:[%s2] sm:$0x1]
    %v34 = vlaneseq
    %v35 = vshrl.u32 %v34, 7
    %v36 = vsub.s32 0, %v35
    %v37 = vrot.slane %v32, %v36
    %v41 = vunpack.c.l.b16 %v30
    %v42 = vunpack.c.l.b16 %v31
    %v43 = vpack.c.b16 %v42, %v41
    %vm45 = vcmask 130048
    %v47 = vsel %vm45, %v29, 0
    %49 = vmatprep.subr.bf16.mxu0 0
    %50 = vmatpush1.bf16.msra.mxu0 %v43
    %51 = vmatprep.subr.bf16.mxu0 0
    %52 = vmatpush1.bf16.msra.mxu0 0
    %53 = vmatprep.subr.bf16.mxu0 0
    %54 = vmatpush1.bf16.msra.mxu0 0
    %55 = vmatprep.subr.bf16.mxu0 0
    %56 = vmatpush1.bf16.msra.mxu0 0
    %57 = vmatprep.subr.bf16.mxu0 0
    %58 = vmatpush1.bf16.msra.mxu0 0
    %59 = vmatprep.subr.bf16.mxu0 0
    %60 = vmatpush1.bf16.msra.mxu0 0
    %61 = vmatprep.subr.bf16.mxu0 0
    %62 = vmatpush1.bf16.msra.mxu0 0
    %63 = vmatprep.subr.bf16.mxu0 0
    %64 = vmatpush1.bf16.msra.mxu0 0
    %65 = vmatprep.subr.bf16.mxu0 0
    %66 = vmatpush1.bf16.msra.mxu0 0
    %67 = vmatprep.subr.bf16.mxu0 0
    %68 = vmatpush1.bf16.msra.mxu0 0
    %69 = vmatprep.subr.bf16.mxu0 0
    %70 = vmatpush1.bf16.msra.mxu0 0
    %71 = vmatprep.subr.bf16.mxu0 0
    %72 = vmatpush1.bf16.msra.mxu0 0
    %73 = vmatprep.subr.bf16.mxu0 0
    %74 = vmatpush1.bf16.msra.mxu0 0
    %75 = vmatprep.subr.bf16.mxu0 0
    %76 = vmatpush1.bf16.msra.mxu0 0
    %77 = vmatprep.subr.bf16.mxu0 0
    %78 = vmatpush1.bf16.msra.mxu0 0
    %79 = vmatprep.subr.bf16.mxu0 0
    %80 = vmatpush1.bf16.msra.mxu0 0
    %81 = vmatprep.mubr.bf16.mxu0 0
    %82 = vmatmul.mubr.bf16.gmra.mrb[0].mxu0 %v47
    %v83 = vpop.f32.mrb[0].mxu0
    %v84 = vadd.f32 %v37, %v83
    %v85 = vpop.f32.mrb[0].mxu0
    %v86 = vpop.f32.mrb[0].mxu0
    %v87 = vpop.f32.mrb[0].mxu0
    %88 = vdwg.mxu0
    %v89 = vmax.f32 %v84, 0.0
    %v90 = vpack.c.bf16 %v89, %v89
    %v91 = vld [vmem:[%s3] sm:$0xf]
    %v92 = vld [vmem:[%s3 + $0x4] sm:$0xf]
    %v93 = vld [vmem:[%s3 + $0x8] sm:$0xf]
    %v94 = vld [vmem:[%s3 + $0xc] sm:$0xf]
    %v95 = vld [vmem:[%s3 + $0x10] sm:$0xf]
    %v96 = vld [vmem:[%s3 + $0x14] sm:$0xf]
    %v97 = vld [vmem:[%s3 + $0x18] sm:$0xf]
    %v98 = vld [vmem:[%s3 + $0x1c] sm:$0xf]
    %v99 = vld [vmem:[%s3 + $0x20] sm:$0xf]
    %v100 = vld [vmem:[%s3 + $0x24] sm:$0xf]
    %v101 = vld [vmem:[%s3 + $0x28] sm:$0xf]
    %v102 = vld [vmem:[%s3 + $0x2c] sm:$0xf]
    %v103 = vld [vmem:[%s3 + $0x30] sm:$0xf]
    %v104 = vld [vmem:[%s3 + $0x34] sm:$0xf]
    %v105 = vld [vmem:[%s3 + $0x38] sm:$0xf]
    %v106 = vld [vmem:[%s3 + $0x3c] sm:$0xf]
    %v107 = vld [vmem:[%s4] sm:$0x1]
    %v109 = vlaneseq
    %v110 = vshrl.u32 %v109, 7
    %v111 = vsub.s32 0, %v110
    %v112 = vrot.slane %v107, %v111
    %v130 = vunpack.c.l.b16 %v91
    %v131 = vunpack.c.l.b16 %v92
    %v132 = vunpack.c.l.b16 %v93
    %v133 = vunpack.c.l.b16 %v94
    %v134 = vunpack.c.l.b16 %v95
    %v135 = vunpack.c.l.b16 %v96
    %v136 = vunpack.c.l.b16 %v97
    %v137 = vunpack.c.l.b16 %v98
    %v138 = vunpack.c.l.b16 %v99
    %v139 = vunpack.c.l.b16 %v100
    %v140 = vunpack.c.l.b16 %v101
    %v141 = vunpack.c.l.b16 %v102
    %v142 = vunpack.c.l.b16 %v103
    %v143 = vunpack.c.l.b16 %v104
    %v144 = vunpack.c.l.b16 %v105
    %v145 = vunpack.c.l.b16 %v106
    %v146 = vpack.c.b16 %v131, %v130
    %v147 = vpack.c.b16 %v133, %v132
    %v148 = vpack.c.b16 %v135, %v134
    %v149 = vpack.c.b16 %v137, %v136
    %v150 = vpack.c.b16 %v139, %v138
    %v151 = vpack.c.b16 %v141, %v140
    %v152 = vpack.c.b16 %v143, %v142
    %v153 = vpack.c.b16 %v145, %v144
    %162 = vmatprep.subr.bf16.mxu0 0
    %163 = vmatpush1.bf16.msra.mxu0 %v146
    %164 = vmatprep.subr.bf16.mxu0 0
    %165 = vmatpush1.bf16.msra.mxu0 %v147
    %166 = vmatprep.subr.bf16.mxu0 0
    %167 = vmatpush1.bf16.msra.mxu0 %v148
    %168 = vmatprep.subr.bf16.mxu0 0
    %169 = vmatpush1.bf16.msra.mxu0 %v149
    %170 = vmatprep.subr.bf16.mxu0 0
    %171 = vmatpush1.bf16.msra.mxu0 %v150
    %172 = vmatprep.subr.bf16.mxu0 0
    %173 = vmatpush1.bf16.msra.mxu0 %v151
    %174 = vmatprep.subr.bf16.mxu0 0
    %175 = vmatpush1.bf16.msra.mxu0 %v152
    %176 = vmatprep.subr.bf16.mxu0 0
    %177 = vmatpush1.bf16.msra.mxu0 %v153
    %178 = vmatprep.subr.bf16.mxu0 0
    %179 = vmatpush1.bf16.msra.mxu0 0
    %180 = vmatprep.subr.bf16.mxu0 0
    %181 = vmatpush1.bf16.msra.mxu0 0
    %182 = vmatprep.subr.bf16.mxu0 0
    %183 = vmatpush1.bf16.msra.mxu0 0
    %184 = vmatprep.subr.bf16.mxu0 0
    %185 = vmatpush1.bf16.msra.mxu0 0
    %186 = vmatprep.subr.bf16.mxu0 0
    %187 = vmatpush1.bf16.msra.mxu0 0
    %188 = vmatprep.subr.bf16.mxu0 0
    %189 = vmatpush1.bf16.msra.mxu0 0
    %190 = vmatprep.subr.bf16.mxu0 0
    %191 = vmatpush1.bf16.msra.mxu0 0
    %192 = vmatprep.subr.bf16.mxu0 0
    %193 = vmatpush1.bf16.msra.mxu0 0
    %194 = vmatprep.mubr.bf16.mxu0 0
    %195 = vmatmul.mubr.bf16.gmra.mrb[0].mxu0 %v90
    %v196 = vpop.f32.mrb[0].mxu0
    %v197 = vadd.f32 %v112, %v196
    %v198 = vpop.f32.mrb[0].mxu0
    %v199 = vpop.f32.mrb[0].mxu0
    %v200 = vpop.f32.mrb[0].mxu0
    %201 = vdwg.mxu0
    %v202 = vmax.f32 %v197, 0.0
    %v203 = vpack.c.bf16 %v202, %v202
    %v204 = vld [vmem:[%s5] sm:$0xf]
    %v205 = vld [vmem:[%s5 + $0x4] sm:$0xf]
    %v206 = vld [vmem:[%s5 + $0x8] sm:$0xf]
    %v207 = vld [vmem:[%s5 + $0xc] sm:$0xf]
    %v208 = vld [vmem:[%s5 + $0x10] sm:$0xf]
    %v209 = vld [vmem:[%s5 + $0x14] sm:$0xf]
    %v210 = vld [vmem:[%s5 + $0x18] sm:$0xf]
    %v211 = vld [vmem:[%s5 + $0x1c] sm:$0xf]
    %v212 = vld [vmem:[%s5 + $0x20] sm:$0xf]
    %v213 = vld [vmem:[%s5 + $0x24] sm:$0xf]
    %v214 = vld [vmem:[%s5 + $0x28] sm:$0xf]
    %v215 = vld [vmem:[%s5 + $0x2c] sm:$0xf]
    %v216 = vld [vmem:[%s5 + $0x30] sm:$0xf]
    %v217 = vld [vmem:[%s5 + $0x34] sm:$0xf]
    %v218 = vld [vmem:[%s5 + $0x38] sm:$0xf]
    %v219 = vld [vmem:[%s5 + $0x3c] sm:$0xf]
    %v220 = vld [vmem:[%s6] sm:$0x1]
    %v222 = vlaneseq
    %v223 = vshrl.u32 %v222, 7
    %v224 = vsub.s32 0, %v223
    %v225 = vrot.slane %v220, %v224
    %v243 = vunpack.c.l.b16 %v204
    %v244 = vunpack.c.l.b16 %v205
    %v245 = vunpack.c.l.b16 %v206
    %v246 = vunpack.c.l.b16 %v207
    %v247 = vunpack.c.l.b16 %v208
    %v248 = vunpack.c.l.b16 %v209
    %v249 = vunpack.c.l.b16 %v210
    %v250 = vunpack.c.l.b16 %v211
    %v251 = vunpack.c.l.b16 %v212
    %v252 = vunpack.c.l.b16 %v213
    %v253 = vunpack.c.l.b16 %v214
    %v254 = vunpack.c.l.b16 %v215
    %v255 = vunpack.c.l.b16 %v216
    %v256 = vunpack.c.l.b16 %v217
    %v257 = vunpack.c.l.b16 %v218
    %v258 = vunpack.c.l.b16 %v219
    %v259 = vpack.c.b16 %v244, %v243
    %v260 = vpack.c.b16 %v246, %v245
    %v261 = vpack.c.b16 %v248, %v247
    %v262 = vpack.c.b16 %v250, %v249
    %v263 = vpack.c.b16 %v252, %v251
    %v264 = vpack.c.b16 %v254, %v253
    %v265 = vpack.c.b16 %v256, %v255
    %v266 = vpack.c.b16 %v258, %v257
    %275 = vmatprep.subr.bf16.mxu0 0
    %276 = vmatpush1.bf16.msra.mxu0 %v259
    %277 = vmatprep.subr.bf16.mxu0 0
    %278 = vmatpush1.bf16.msra.mxu0 %v260
    %279 = vmatprep.subr.bf16.mxu0 0
    %280 = vmatpush1.bf16.msra.mxu0 %v261
    %281 = vmatprep.subr.bf16.mxu0 0
    %282 = vmatpush1.bf16.msra.mxu0 %v262
    %283 = vmatprep.subr.bf16.mxu0 0
    %284 = vmatpush1.bf16.msra.mxu0 %v263
    %285 = vmatprep.subr.bf16.mxu0 0
    %286 = vmatpush1.bf16.msra.mxu0 %v264
    %287 = vmatprep.subr.bf16.mxu0 0
    %288 = vmatpush1.bf16.msra.mxu0 %v265
    %289 = vmatprep.subr.bf16.mxu0 0
    %290 = vmatpush1.bf16.msra.mxu0 %v266
    %291 = vmatprep.subr.bf16.mxu0 0
    %292 = vmatpush1.bf16.msra.mxu0 0
    %293 = vmatprep.subr.bf16.mxu0 0
    %294 = vmatpush1.bf16.msra.mxu0 0
    %295 = vmatprep.subr.bf16.mxu0 0
    %296 = vmatpush1.bf16.msra.mxu0 0
    %297 = vmatprep.subr.bf16.mxu0 0
    %298 = vmatpush1.bf16.msra.mxu0 0
    %299 = vmatprep.subr.bf16.mxu0 0
    %300 = vmatpush1.bf16.msra.mxu0 0
    %301 = vmatprep.subr.bf16.mxu0 0
    %302 = vmatpush1.bf16.msra.mxu0 0
    %303 = vmatprep.subr.bf16.mxu0 0
    %304 = vmatpush1.bf16.msra.mxu0 0
    %305 = vmatprep.subr.bf16.mxu0 0
    %306 = vmatpush1.bf16.msra.mxu0 0
    %307 = vmatprep.mubr.bf16.mxu0 0
    %308 = vmatmul.mubr.bf16.gmra.mrb[0].mxu0 %v203
    %v309 = vpop.f32.mrb[0].mxu0
    %v310 = vadd.f32 %v225, %v309
    %v311 = vpop.f32.mrb[0].mxu0
    %v312 = vpop.f32.mrb[0].mxu0
    %v313 = vpop.f32.mrb[0].mxu0
    %314 = vdwg.mxu0
    %vm315 = vcmask 123904
    %316 = vst.msk [vmem:[#allocation2] sm:$0x3] %vm315, %v310
    // Predicated region
    $region30: #{tpu_custom_call.1} parent=1 // pred_check
      _
    $region31: #{tpu_custom_call.1} parent=1 // pred_check_branch
      %318 = sbr.rel (0) target = $region33
    $region32: #{tpu_custom_call.1} parent=1 // pred_region
      %s320 = ssub.s32 32, 32
      %321 = vsyncadd [#allocation3], %s320
      %s323 = sshll.u32 [#allocation2], 4
      %s324 = int_to_ptr.vmem [resolvable:$true] %s323
      %326 = dma.vmem_to_hbm [thread:$0]  %s324, 32, %s7, [#allocation3]
    $region33: #{tpu_custom_call.1} parent=1 // pred_fallthru
      _
    // Predicated region
    $region34: #{tpu_custom_call.1} parent=1 // pred_check
      _
    $region35: #{tpu_custom_call.1} parent=1 // pred_check_branch
      %328 = sbr.rel (0) target = $region37
    $region36: #{tpu_custom_call.1} parent=1 // pred_region
      %329 = dma.done [#allocation3], 32
    $region37: #{tpu_custom_call.1} parent=1 // pred_fallthru
      _
    %330 = vsyncpa [#allocation3], 1

// kernel: tpu_custom_call.1
$region0: #{tpu_custom_call.1}
  #allocation0 [shape = 'u32[]', space=smem, size = 0x4, offset = 0x4, fixed_abs, tag = 'smem constant byte address 0x4 - core index']
  #allocation1 [shape = 'u32[144,128]{1,0:T(1,128)}', space=vmem, size = 0x12000, scoped, tag = 'internal scratch']
  %s0 = inlined_call_operand.vmem [shape: f32[2,16], index: 0, kind: input, shape index: {}]
  %s1 = inlined_call_operand.vmem [shape: bf16[16,128], index: 1, kind: input, shape index: {}]
  %s2 = inlined_call_operand.vmem [shape: f32[1,128], index: 2, kind: input, shape index: {}]
  %s3 = inlined_call_operand.vmem [shape: bf16[128,128], index: 3, kind: input, shape index: {}]
  %s4 = inlined_call_operand.vmem [shape: f32[1,128], index: 4, kind: input, shape index: {}]
  %s5 = inlined_call_operand.vmem [shape: bf16[128,16], index: 5, kind: input, shape index: {}]
  %s6 = inlined_call_operand.vmem [shape: f32[1,16], index: 6, kind: input, shape index: {}]
  %s7 = inlined_call_operand.hbm [shape: f32[2,16], index: 7, kind: output, shape index: {}]
  %s8 = sld [smem:[#allocation0]]
  $region38: #{tpu_custom_call.1} parent=0
    _
  %s10 = ssub.s32 1, %s8
  %s11 = scalar_select 0, %s10, %s8
  $region1: #{tpu_custom_call.1} parent=0
    #allocation2 [shape = 'u8[1024]{0}', space=vmem, size = 0x400, scoped, tag = 'output window, operand 0, single buffered']
    #allocation3 [shape = 's32[1]{0}', space=sflag, size = 0x4, scoped, tag = 'scoped memory for tpu_custom_call.1']
    %12 = vsyncpa [#allocation3], 0
    // Predicated region
    $region2: #{tpu_custom_call.1} parent=1 // pred_check
      _
    $region3: #{tpu_custom_call.1} parent=1 // pred_check_branch
      %14 = sbr.rel (0) target = $region5
    $region4: #{tpu_custom_call.1} parent=1 // pred_region
      _
    $region5: #{tpu_custom_call.1} parent=1 // pred_fallthru
      _
    // Predicated region
    $region6: #{tpu_custom_call.1} parent=1 // pred_check
      _
    $region7: #{tpu_custom_call.1} parent=1 // pred_check_branch
      %16 = sbr.rel (0) target = $region9
    $region8: #{tpu_custom_call.1} parent=1 // pred_region
      _
    $region9: #{tpu_custom_call.1} parent=1 // pred_fallthru
      _
    // Predicated region
    $region10: #{tpu_custom_call.1} parent=1 // pred_check
      _
    $region11: #{tpu_custom_call.1} parent=1 // pred_check_branch
      %18 = sbr.rel (0) target = $region13
    $region12: #{tpu_custom_call.1} parent=1 // pred_region
      _
    $region13: #{tpu_custom_call.1} parent=1 // pred_fallthru
      _
    // Predicated region
    $region14: #{tpu_custom_call.1} parent=1 // pred_check
      _
    $region15: #{tpu_custom_call.1} parent=1 // pred_check_branch
      %20 = sbr.rel (0) target = $region17
    $region16: #{tpu_custom_call.1} parent=1 // pred_region
      _
    $region17: #{tpu_custom_call.1} parent=1 // pred_fallthru
      _
    // Predicated region
    $region18: #{tpu_custom_call.1} parent=1 // pred_check
      _
    $region19: #{tpu_custom_call.1} parent=1 // pred_check_branch
      %22 = sbr.rel (0) target = $region21
    $region20: #{tpu_custom_call.1} parent=1 // pred_region
      _
    $region21: #{tpu_custom_call.1} parent=1 // pred_fallthru
      _
    // Predicated region
    $region22: #{tpu_custom_call.1} parent=1 // pred_check
      _
    $region23: #{tpu_custom_call.1} parent=1 // pred_check_branch
      %24 = sbr.rel (0) target = $region25
    $region24: #{tpu_custom_call.1} parent=1 // pred_region
      _
    $region25: #{tpu_custom_call.1} parent=1 // pred_fallthru
      _
    // Predicated region
    $region26: #{tpu_custom_call.1} parent=1 // pred_check
      _
    $region27: #{tpu_custom_call.1} parent=1 // pred_check_branch
      %26 = sbr.rel (0) target = $region29
    $region28: #{tpu_custom_call.1} parent=1 // pred_region
      _
    $region29: #{tpu_custom_call.1} parent=1 // pred_fallthru
      _
    %v28 = vld [vmem:[%s0] sm:$0x3]
    %v29 = vpack.c.bf16 %v28, %v28
    %v30 = vld [vmem:[%s1] sm:$0xf]
    %v31 = vld [vmem:[%s1 + $0x4] sm:$0xf]
    %v32 = vld [vmem:[%s2] sm:$0x1]
    %v34 = vlaneseq
    %v35 = vshrl.u32 %v34, 7
    %v36 = vsub.s32 0, %v35
    %v37 = vrot.slane %v32, %v36
    %v41 = vunpack.c.l.b16 %v30
    %v42 = vunpack.c.l.b16 %v31
    %v43 = vpack.c.b16 %v42, %v41
    %vm45 = vcmask 130048
    %v47 = vsel %vm45, %v29, 0
    %49 = vmatprep.subr.bf16.mxu0 0
    %50 = vmatpush1.bf16.msra.mxu0 %v43
    %51 = vmatprep.subr.bf16.mxu0 0
    %52 = vmatpush1.bf16.msra.mxu0 0
    %53 = vmatprep.subr.bf16.mxu0 0
    %54 = vmatpush1.bf16.msra.mxu0 0
    %55 = vmatprep.subr.bf16.mxu0 0
    %56 = vmatpush1.bf16.msra.mxu0 0
    %57 = vmatprep.subr.bf16.mxu0 0
    %58 = vmatpush1.bf16.msra.mxu0 0
    %59 = vmatprep.subr.bf16.mxu0 0
    %60 = vmatpush1.bf16.msra.mxu0 0
    %61 = vmatprep.subr.bf16.mxu0 0
    %62 = vmatpush1.bf16.msra.mxu0 0
    %63 = vmatprep.subr.bf16.mxu0 0
    %64 = vmatpush1.bf16.msra.mxu0 0
    %65 = vmatprep.subr.bf16.mxu0 0
    %66 = vmatpush1.bf16.msra.mxu0 0
    %67 = vmatprep.subr.bf16.mxu0 0
    %68 = vmatpush1.bf16.msra.mxu0 0
    %69 = vmatprep.subr.bf16.mxu0 0
    %70 = vmatpush1.bf16.msra.mxu0 0
    %71 = vmatprep.subr.bf16.mxu0 0
    %72 = vmatpush1.bf16.msra.mxu0 0
    %73 = vmatprep.subr.bf16.mxu0 0
    %74 = vmatpush1.bf16.msra.mxu0 0
    %75 = vmatprep.subr.bf16.mxu0 0
    %76 = vmatpush1.bf16.msra.mxu0 0
    %77 = vmatprep.subr.bf16.mxu0 0
    %78 = vmatpush1.bf16.msra.mxu0 0
    %79 = vmatprep.subr.bf16.mxu0 0
    %80 = vmatpush1.bf16.msra.mxu0 0
    %81 = vmatprep.mubr.bf16.mxu0 0
    %82 = vmatmul.mubr.bf16.gmra.mrb[0].mxu0 %v47
    %v83 = vpop.f32.mrb[0].mxu0
    %v84 = vadd.f32 %v37, %v83
    %v85 = vpop.f32.mrb[0].mxu0
    %v86 = vpop.f32.mrb[0].mxu0
    %v87 = vpop.f32.mrb[0].mxu0
    %88 = vdwg.mxu0
    %v89 = vmax.f32 %v84, 0.0
    %v90 = vpack.c.bf16 %v89, %v89
    %v91 = vld [vmem:[%s3] sm:$0xf]
    %v92 = vld [vmem:[%s3 + $0x4] sm:$0xf]
    %v93 = vld [vmem:[%s3 + $0x8] sm:$0xf]
    %v94 = vld [vmem:[%s3 + $0xc] sm:$0xf]
    %v95 = vld [vmem:[%s3 + $0x10] sm:$0xf]
    %v96 = vld [vmem:[%s3 + $0x14] sm:$0xf]
    %v97 = vld [vmem:[%s3 + $0x18] sm:$0xf]
    %v98 = vld [vmem:[%s3 + $0x1c] sm:$0xf]
    %v99 = vld [vmem:[%s3 + $0x20] sm:$0xf]
    %v100 = vld [vmem:[%s3 + $0x24] sm:$0xf]
    %v101 = vld [vmem:[%s3 + $0x28] sm:$0xf]
    %v102 = vld [vmem:[%s3 + $0x2c] sm:$0xf]
    %v103 = vld [vmem:[%s3 + $0x30] sm:$0xf]
    %v104 = vld [vmem:[%s3 + $0x34] sm:$0xf]
    %v105 = vld [vmem:[%s3 + $0x38] sm:$0xf]
    %v106 = vld [vmem:[%s3 + $0x3c] sm:$0xf]
    %v107 = vld [vmem:[%s4] sm:$0x1]
    %v109 = vlaneseq
    %v110 = vshrl.u32 %v109, 7
    %v111 = vsub.s32 0, %v110
    %v112 = vrot.slane %v107, %v111
    %v130 = vunpack.c.l.b16 %v91
    %v131 = vunpack.c.l.b16 %v92
    %v132 = vunpack.c.l.b16 %v93
    %v133 = vunpack.c.l.b16 %v94
    %v134 = vunpack.c.l.b16 %v95
    %v135 = vunpack.c.l.b16 %v96
    %v136 = vunpack.c.l.b16 %v97
    %v137 = vunpack.c.l.b16 %v98
    %v138 = vunpack.c.l.b16 %v99
    %v139 = vunpack.c.l.b16 %v100
    %v140 = vunpack.c.l.b16 %v101
    %v141 = vunpack.c.l.b16 %v102
    %v142 = vunpack.c.l.b16 %v103
    %v143 = vunpack.c.l.b16 %v104
    %v144 = vunpack.c.l.b16 %v105
    %v145 = vunpack.c.l.b16 %v106
    %v146 = vpack.c.b16 %v131, %v130
    %v147 = vpack.c.b16 %v133, %v132
    %v148 = vpack.c.b16 %v135, %v134
    %v149 = vpack.c.b16 %v137, %v136
    %v150 = vpack.c.b16 %v139, %v138
    %v151 = vpack.c.b16 %v141, %v140
    %v152 = vpack.c.b16 %v143, %v142
    %v153 = vpack.c.b16 %v145, %v144
    %162 = vmatprep.subr.bf16.mxu0 0
    %163 = vmatpush1.bf16.msra.mxu0 %v146
    %164 = vmatprep.subr.bf16.mxu0 0
    %165 = vmatpush1.bf16.msra.mxu0 %v147
    %166 = vmatprep.subr.bf16.mxu0 0
    %167 = vmatpush1.bf16.msra.mxu0 %v148
    %168 = vmatprep.subr.bf16.mxu0 0
    %169 = vmatpush1.bf16.msra.mxu0 %v149
    %170 = vmatprep.subr.bf16.mxu0 0
    %171 = vmatpush1.bf16.msra.mxu0 %v150
    %172 = vmatprep.subr.bf16.mxu0 0
    %173 = vmatpush1.bf16.msra.mxu0 %v151
    %174 = vmatprep.subr.bf16.mxu0 0
    %175 = vmatpush1.bf16.msra.mxu0 %v152
    %176 = vmatprep.subr.bf16.mxu0 0
    %177 = vmatpush1.bf16.msra.mxu0 %v153
    %178 = vmatprep.subr.bf16.mxu0 0
    %179 = vmatpush1.bf16.msra.mxu0 0
    %180 = vmatprep.subr.bf16.mxu0 0
    %181 = vmatpush1.bf16.msra.mxu0 0
    %182 = vmatprep.subr.bf16.mxu0 0
    %183 = vmatpush1.bf16.msra.mxu0 0
    %184 = vmatprep.subr.bf16.mxu0 0
    %185 = vmatpush1.bf16.msra.mxu0 0
    %186 = vmatprep.subr.bf16.mxu0 0
    %187 = vmatpush1.bf16.msra.mxu0 0
    %188 = vmatprep.subr.bf16.mxu0 0
    %189 = vmatpush1.bf16.msra.mxu0 0
    %190 = vmatprep.subr.bf16.mxu0 0
    %191 = vmatpush1.bf16.msra.mxu0 0
    %192 = vmatprep.subr.bf16.mxu0 0
    %193 = vmatpush1.bf16.msra.mxu0 0
    %194 = vmatprep.mubr.bf16.mxu0 0
    %195 = vmatmul.mubr.bf16.gmra.mrb[0].mxu0 %v90
    %v196 = vpop.f32.mrb[0].mxu0
    %v197 = vadd.f32 %v112, %v196
    %v198 = vpop.f32.mrb[0].mxu0
    %v199 = vpop.f32.mrb[0].mxu0
    %v200 = vpop.f32.mrb[0].mxu0
    %201 = vdwg.mxu0
    %v202 = vmax.f32 %v197, 0.0
    %v203 = vpack.c.bf16 %v202, %v202
    %v204 = vld [vmem:[%s5] sm:$0xf]
    %v205 = vld [vmem:[%s5 + $0x4] sm:$0xf]
    %v206 = vld [vmem:[%s5 + $0x8] sm:$0xf]
    %v207 = vld [vmem:[%s5 + $0xc] sm:$0xf]
    %v208 = vld [vmem:[%s5 + $0x10] sm:$0xf]
    %v209 = vld [vmem:[%s5 + $0x14] sm:$0xf]
    %v210 = vld [vmem:[%s5 + $0x18] sm:$0xf]
    %v211 = vld [vmem:[%s5 + $0x1c] sm:$0xf]
    %v212 = vld [vmem:[%s5 + $0x20] sm:$0xf]
    %v213 = vld [vmem:[%s5 + $0x24] sm:$0xf]
    %v214 = vld [vmem:[%s5 + $0x28] sm:$0xf]
    %v215 = vld [vmem:[%s5 + $0x2c] sm:$0xf]
    %v216 = vld [vmem:[%s5 + $0x30] sm:$0xf]
    %v217 = vld [vmem:[%s5 + $0x34] sm:$0xf]
    %v218 = vld [vmem:[%s5 + $0x38] sm:$0xf]
    %v219 = vld [vmem:[%s5 + $0x3c] sm:$0xf]
    %v220 = vld [vmem:[%s6] sm:$0x1]
    %v222 = vlaneseq
    %v223 = vshrl.u32 %v222, 7
    %v224 = vsub.s32 0, %v223
    %v225 = vrot.slane %v220, %v224
    %v243 = vunpack.c.l.b16 %v204
    %v244 = vunpack.c.l.b16 %v205
    %v245 = vunpack.c.l.b16 %v206
    %v246 = vunpack.c.l.b16 %v207
    %v247 = vunpack.c.l.b16 %v208
    %v248 = vunpack.c.l.b16 %v209
    %v249 = vunpack.c.l.b16 %v210
    %v250 = vunpack.c.l.b16 %v211
    %v251 = vunpack.c.l.b16 %v212
    %v252 = vunpack.c.l.b16 %v213
    %v253 = vunpack.c.l.b16 %v214
    %v254 = vunpack.c.l.b16 %v215
    %v255 = vunpack.c.l.b16 %v216
    %v256 = vunpack.c.l.b16 %v217
    %v257 = vunpack.c.l.b16 %v218
    %v258 = vunpack.c.l.b16 %v219
    %v259 = vpack.c.b16 %v244, %v243
    %v260 = vpack.c.b16 %v246, %v245
    %v261 = vpack.c.b16 %v248, %v247
    %v262 = vpack.c.b16 %v250, %v249
    %v263 = vpack.c.b16 %v252, %v251
    %v264 = vpack.c.b16 %v254, %v253
    %v265 = vpack.c.b16 %v256, %v255
    %v266 = vpack.c.b16 %v258, %v257
    %275 = vmatprep.subr.bf16.mxu0 0
    %276 = vmatpush1.bf16.msra.mxu0 %v259
    %277 = vmatprep.subr.bf16.mxu0 0
    %278 = vmatpush1.bf16.msra.mxu0 %v260
    %279 = vmatprep.subr.bf16.mxu0 0
    %280 = vmatpush1.bf16.msra.mxu0 %v261
    %281 = vmatprep.subr.bf16.mxu0 0
    %282 = vmatpush1.bf16.msra.mxu0 %v262
    %283 = vmatprep.subr.bf16.mxu0 0
    %284 = vmatpush1.bf16.msra.mxu0 %v263
    %285 = vmatprep.subr.bf16.mxu0 0
    %286 = vmatpush1.bf16.msra.mxu0 %v264
    %287 = vmatprep.subr.bf16.mxu0 0
    %288 = vmatpush1.bf16.msra.mxu0 %v265
    %289 = vmatprep.subr.bf16.mxu0 0
    %290 = vmatpush1.bf16.msra.mxu0 %v266
    %291 = vmatprep.subr.bf16.mxu0 0
    %292 = vmatpush1.bf16.msra.mxu0 0
    %293 = vmatprep.subr.bf16.mxu0 0
    %294 = vmatpush1.bf16.msra.mxu0 0
    %295 = vmatprep.subr.bf16.mxu0 0
    %296 = vmatpush1.bf16.msra.mxu0 0
    %297 = vmatprep.subr.bf16.mxu0 0
    %298 = vmatpush1.bf16.msra.mxu0 0
    %299 = vmatprep.subr.bf16.mxu0 0
    %300 = vmatpush1.bf16.msra.mxu0 0
    %301 = vmatprep.subr.bf16.mxu0 0
    %302 = vmatpush1.bf16.msra.mxu0 0
    %303 = vmatprep.subr.bf16.mxu0 0
    %304 = vmatpush1.bf16.msra.mxu0 0
    %305 = vmatprep.subr.bf16.mxu0 0
    %306 = vmatpush1.bf16.msra.mxu0 0
    %307 = vmatprep.mubr.bf16.mxu0 0
    %308 = vmatmul.mubr.bf16.gmra.mrb[0].mxu0 %v203
    %v309 = vpop.f32.mrb[0].mxu0
    %v310 = vadd.f32 %v225, %v309
    %v311 = vpop.f32.mrb[0].mxu0
    %v312 = vpop.f32.mrb[0].mxu0
    %v313 = vpop.f32.mrb[0].mxu0
    %314 = vdwg.mxu0
    %vm315 = vcmask 123904
    %316 = vst.msk [vmem:[#allocation2] sm:$0x3] %vm315, %v310
    // Predicated region
    $region30: #{tpu_custom_call.1} parent=1 // pred_check
      _
    $region31: #{tpu_custom_call.1} parent=1 // pred_check_branch
      %318 = sbr.rel (0) target = $region33
    $region32: #{tpu_custom_call.1} parent=1 // pred_region
      %s320 = ssub.s32 32, 32
      %321 = vsyncadd [#allocation3], %s320
      %s323 = sshll.u32 [#allocation2], 4
      %s324 = int_to_ptr.vmem [resolvable:$true] %s323
      %326 = dma.vmem_to_hbm [thread:$0]  %s324, 32, %s7, [#allocation3]
    $region33: #{tpu_custom_call.1} parent=1 // pred_fallthru
      _
    // Predicated region
    $region34: #{tpu_custom_call.1} parent=1 // pred_check
      _
    $region35: #{tpu_custom_call.1} parent=1 // pred_check_branch
      %328 = sbr.rel (0) target = $region37
    $region36: #{tpu_custom_call.1} parent=1 // pred_region
      %329 = dma.done [#allocation3], 32
    $region37: #{tpu_custom_call.1} parent=1 // pred_fallthru
      _
    %330 = vsyncpa [#allocation3], 1

</llo_original>
